<compile_context>
chip_gen: v7x
topology: tpu7x:2x2x1
jax: 0.10.0
libtpu: 0.0.40
codegen_flags: <defaults>
</compile_context>

<pallas_src>
import jax
import jax.numpy as jnp
from jax.experimental import pallas as pl
from jax.experimental.pallas import tpu as pltpu


# ---------------------------------------------------------------------------
# Streaming modulation kernel:  out = x * (gamma + 1) + beta  on (R, T) tiles.
# ---------------------------------------------------------------------------
def _film_mod_kernel(x_ref, g1_ref, beta_ref, o_ref):
    # x_ref: (r_tile, t_tile); g1_ref/beta_ref: (r_tile, 1) f32.
    x = x_ref[...]
    g1 = g1_ref[...].astype(x.dtype)
    beta = beta_ref[...].astype(x.dtype)
    o_ref[...] = x * g1 + beta


# ---------------------------------------------------------------------------
# Tiling helpers.
# ---------------------------------------------------------------------------
def _round_up(v, m):
    return ((v + m - 1) // m) * m


def _sublane_align(dtype):
    """Dtype-native sublane multiple: 8 for f32, 16 for bf16, 32 for int8."""
    bits = jnp.dtype(dtype).itemsize * 8
    return max(8, 256 // bits)


def _pick_tile(dim, align, cap):
    """Largest multiple of `align` that divides `dim` and is <= cap.

    `dim` is guaranteed to be a multiple of `align` (wrapper pads), so this
    always terminates at an aligned divisor (worst case `align`)."""
    t = min(dim, max(align, (cap // align) * align))
    while dim % t != 0:
        t -= align
    return t


def _block_budget_bytes():
    """(per-block byte budget, scoped-VMEM limit), gated on chip generation."""
    vmem_phys = None
    try:
        vmem_phys = getattr(pltpu.get_tpu_info(), "vmem_capacity_bytes", None)
    except Exception:
        vmem_phys = None
    if vmem_phys is not None and vmem_phys >= 96 * 1024 * 1024:
        # v5e / v6e: 128 MiB VMEM -> bigger blocks amortize per-step overhead.
        return 6 * 1024 * 1024, 64 * 1024 * 1024
    # v7x (64 MiB per TC) or unknown: stay conservative.
    # Live footprint ~ 4 double-buffered blocks = ~12 MiB << 32 MiB scoped.
    return 3 * 1024 * 1024, 32 * 1024 * 1024


# ---------------------------------------------------------------------------
# Forward wrapper.
# ---------------------------------------------------------------------------
def film_forward(x, r, w_gamma, b_gamma, w_beta, b_beta):
    """FiLM forward.

    x: (B, C, T); r: (B, Din); w_*: (C, Din) (PyTorch Linear layout); b_*: (C,).
    Returns (B, C, T) with x.dtype.  If Din == 0, returns x unchanged.
    """
    B, C, T = x.shape
    Din = r.shape[-1] if r is not None else 0
    if Din == 0:
        return x

    # --- 1) gamma+1 and beta: tiny matmuls, plain XLA (no kernel dispatch). ---
    r32 = r.astype(jnp.float32)
    gamma = jnp.einsum("bd,cd->bc", r32, w_gamma.astype(jnp.float32))
    gamma = gamma + b_gamma.astype(jnp.float32)
    beta = jnp.einsum("bd,cd->bc", r32, w_beta.astype(jnp.float32))
    beta = beta + b_beta.astype(jnp.float32)
    g1 = gamma + 1.0

    # --- 2) modulation over flattened (B*C, T), padded to aligned tiles. ---
    R = B * C
    x2 = x.reshape(R, T)                      # free: contiguous reshape
    g1_col = g1.reshape(R, 1)
    beta_col = beta.reshape(R, 1)

    itemsize = jnp.dtype(x.dtype).itemsize
    align = _sublane_align(x.dtype)
    budget, vmem_limit = _block_budget_bytes()

    Tp = _round_up(T, 128)                    # lane-dense last dim
    Rp = _round_up(R, align)                  # dtype-native sublane multiple

    if Tp != T or Rp != R:
        x2 = jnp.pad(x2, ((0, Rp - R), (0, Tp - T)))
    if Rp != R:
        g1_col = jnp.pad(g1_col, ((0, Rp - R), (0, 0)))
        beta_col = jnp.pad(beta_col, ((0, Rp - R), (0, 0)))

    t_cap = max(128, min(4096, budget // (align * itemsize)))
    t_tile = _pick_tile(Tp, 128, t_cap)
    r_cap = max(align, budget // (t_tile * itemsize))
    r_tile = _pick_tile(Rp, align, r_cap)

    num_r = Rp // r_tile
    num_t = Tp // t_tile

    if num_r >= 2 or num_t < 2:
        # Row axis leads; T innermost keeps consecutive x blocks contiguous in
        # HBM and the (r_tile, 1) param blocks resident across the inner loop.
        grid = (num_r, num_t)
        x_spec = pl.BlockSpec((r_tile, t_tile), lambda i, j: (i, j))
        p_spec = pl.BlockSpec((r_tile, 1), lambda i, j: (i, 0))
        o_spec = pl.BlockSpec((r_tile, t_tile), lambda i, j: (i, j))
    else:
        # Single row block: lead with T so the v7x megacore has a shardable
        # parallel axis with >= 2 steps.
        grid = (num_t, num_r)
        x_spec = pl.BlockSpec((r_tile, t_tile), lambda j, i: (i, j))
        p_spec = pl.BlockSpec((r_tile, 1), lambda j, i: (i, 0))
        o_spec = pl.BlockSpec((r_tile, t_tile), lambda j, i: (i, j))

    cost = pl.CostEstimate(
        flops=2 * Rp * Tp,
        transcendentals=0,
        bytes_accessed=2 * Rp * Tp * itemsize + 2 * Rp * 4,
    )

    out2 = pl.pallas_call(
        _film_mod_kernel,
        out_shape=jax.ShapeDtypeStruct((Rp, Tp), x.dtype),
        grid=grid,
        in_specs=[x_spec, p_spec, p_spec],
        out_specs=o_spec,
        compiler_params=pltpu.CompilerParams(
            dimension_semantics=("parallel", "parallel"),
            vmem_limit_bytes=vmem_limit,
        ),
        cost_estimate=cost,
    )(x2, g1_col, beta_col)

    if Tp != T or Rp != R:
        out2 = out2[:R, :T]
    return out2.reshape(B, C, T)


if __name__ == "__main__":
    key = jax.random.PRNGKey(0)
    B, Din, C, T = 2, 8, 4, 16   # batch, input_dim, output_dim (channels), time

    kx, kr, kwg, kbg, kwb, kbb = jax.random.split(key, 6)
    x = jax.random.normal(kx, (B, C, T), dtype=jnp.float32)
    r = jax.random.normal(kr, (B, Din), dtype=jnp.float32)
    # nn.Linear weight layout: (out_features, in_features)
    w_gamma = jax.random.normal(kwg, (C, Din), dtype=jnp.float32) * 0.1
    b_gamma = jax.random.normal(kbg, (C,), dtype=jnp.float32) * 0.1
    w_beta = jax.random.normal(kwb, (C, Din), dtype=jnp.float32) * 0.1
    b_beta = jax.random.normal(kbb, (C,), dtype=jnp.float32) * 0.1

    out = film_forward(x, r, w_gamma, b_gamma, w_beta, b_beta)
    out = jax.block_until_ready(out)

    # Pure-JAX reference for the same math.
    gamma = r @ w_gamma.T + b_gamma
    beta = r @ w_beta.T + b_beta
    ref = x * (gamma + 1.0)[:, :, None] + beta[:, :, None]

    assert out.shape == x.shape and out.dtype == x.dtype
    assert jnp.allclose(out, ref, atol=1e-5, rtol=1e-5)

    # Identity path (input_dim == 0).
    out_id = film_forward(x, jnp.zeros((B, 0), jnp.float32), None, None, None, None)
    assert jnp.array_equal(out_id, x)

    print("KERNEL_OK")
</pallas_src>

<mosaic_0001>
module attributes {stable_mosaic.version = 11 : i64} {
  func.func @_film_mod_kernel(%arg0: i32, %arg1: i32, %arg2: memref<8x128xf32, #tpu.memory_space<vmem>>, %arg3: memref<8x1xf32, #tpu.memory_space<vmem>>, %arg4: memref<8x1xf32, #tpu.memory_space<vmem>>, %arg5: memref<8x128xf32, #tpu.memory_space<vmem>>) attributes {dimension_semantics = [#tpu.dimension_semantics<parallel>, #tpu.dimension_semantics<parallel>], iteration_bounds = array<i64: 1, 1>, scalar_prefetch = 0 : i64, scratch_operands = 0 : i64, tpu.core_type = #tpu.core_type<tc>, window_params = [{transform_indices = @transform_0, window_bounds = array<i64: 8, 128>}, {transform_indices = @transform_1, window_bounds = array<i64: 8, 1>}, {transform_indices = @transform_2, window_bounds = array<i64: 8, 1>}, {transform_indices = @transform_3, window_bounds = array<i64: 8, 128>}]} {
    %c0 = arith.constant 0 : index
    %c0_0 = arith.constant 0 : index
    %0 = vector.load %arg2[%c0, %c0_0] : memref<8x128xf32, #tpu.memory_space<vmem>>, vector<8x128xf32>
    %c0_1 = arith.constant 0 : index
    %c0_2 = arith.constant 0 : index
    %1 = vector.load %arg3[%c0_1, %c0_2] : memref<8x1xf32, #tpu.memory_space<vmem>>, vector<8x1xf32>
    %c0_3 = arith.constant 0 : index
    %c0_4 = arith.constant 0 : index
    %2 = vector.load %arg4[%c0_3, %c0_4] : memref<8x1xf32, #tpu.memory_space<vmem>>, vector<8x1xf32>
    %3 = vector.broadcast %1 : vector<8x1xf32> to vector<8x128xf32>
    %4 = arith.mulf %0, %3 : vector<8x128xf32>
    %5 = vector.broadcast %2 : vector<8x1xf32> to vector<8x128xf32>
    %6 = arith.addf %4, %5 : vector<8x128xf32>
    %c0_5 = arith.constant 0 : index
    %c0_6 = arith.constant 0 : index
    %7 = vector.load %arg5[%c0_5, %c0_6] : memref<8x128xf32, #tpu.memory_space<vmem>>, vector<8x128xf32>
    tpu.vector_store %arg5[%c0_5, %c0_6], %6 {strides = array<i32>} : memref<8x128xf32, #tpu.memory_space<vmem>>, vector<8x128xf32>,
    return
  }
  func.func @transform_0(%arg0: i32, %arg1: i32) -> (i32, i32) {
    %c0_i32 = arith.constant 0 : i32
    return %arg0, %arg1 : i32, i32
  }
  func.func @transform_1(%arg0: i32, %arg1: i32) -> (i32, i32) {
    %c0_i32 = arith.constant 0 : i32
    %c0_i32_0 = arith.constant 0 : i32
    return %arg0, %c0_i32 : i32, i32
  }
  func.func @transform_2(%arg0: i32, %arg1: i32) -> (i32, i32) {
    %c0_i32 = arith.constant 0 : i32
    %c0_i32_0 = arith.constant 0 : i32
    return %arg0, %c0_i32 : i32, i32
  }
  func.func @transform_3(%arg0: i32, %arg1: i32) -> (i32, i32) {
    %c0_i32 = arith.constant 0 : i32
    return %arg0, %arg1 : i32, i32
  }
}

</mosaic_0001>

<llo_original>
// kernel: tpu_custom_call.1
$region0: #{tpu_custom_call.1}
  #allocation0 [shape = 'u32[]', space=smem, size = 0x4, offset = 0x4, fixed_abs, tag = 'smem constant byte address 0x4 - core index']
  #allocation1 [shape = 'u32[144,128]{1,0:T(1,128)}', space=vmem, size = 0x12000, scoped, tag = 'internal scratch']
  %s0 = inlined_call_operand.vmem [shape: f32[8,128], index: 0, kind: input, shape index: {}]
  %s1 = inlined_call_operand.vmem [shape: f32[8,1], index: 1, kind: input, shape index: {}]
  %s2 = inlined_call_operand.vmem [shape: f32[8,1], index: 2, kind: input, shape index: {}]
  %s3 = inlined_call_operand.hbm [shape: f32[8,128], index: 3, kind: output, shape index: {}]
  %s4 = sld [smem:[#allocation0]]
  $region22: #{tpu_custom_call.1} parent=0
    _
  %s6 = ssub.s32 1, %s4
  %s7 = scalar_select 0, %s6, %s4
  $region1: #{tpu_custom_call.1} parent=0
    #allocation2 [shape = 'u8[4096]{0}', space=vmem, size = 0x1000, scoped, tag = 'output window, operand 0, single buffered']
    #allocation3 [shape = 's32[1]{0}', space=sflag, size = 0x4, scoped, tag = 'scoped memory for tpu_custom_call.1']
    %8 = vsyncpa [#allocation3], 0
    // Predicated region
    $region2: #{tpu_custom_call.1} parent=1 // pred_check
      _
    $region3: #{tpu_custom_call.1} parent=1 // pred_check_branch
      %10 = sbr.rel (0) target = $region5
    $region4: #{tpu_custom_call.1} parent=1 // pred_region
      _
    $region5: #{tpu_custom_call.1} parent=1 // pred_fallthru
      _
    // Predicated region
    $region6: #{tpu_custom_call.1} parent=1 // pred_check
      _
    $region7: #{tpu_custom_call.1} parent=1 // pred_check_branch
      %12 = sbr.rel (0) target = $region9
    $region8: #{tpu_custom_call.1} parent=1 // pred_region
      _
    $region9: #{tpu_custom_call.1} parent=1 // pred_fallthru
      _
    // Predicated region
    $region10: #{tpu_custom_call.1} parent=1 // pred_check
      _
    $region11: #{tpu_custom_call.1} parent=1 // pred_check_branch
      %14 = sbr.rel (0) target = $region13
    $region12: #{tpu_custom_call.1} parent=1 // pred_region
      _
    $region13: #{tpu_custom_call.1} parent=1 // pred_fallthru
      _
    %v15 = vld [vmem:[%s0] sm:$0xff]
    %v16 = vld [vmem:[%s1] sm:$0xff]
    %v17 = vld [vmem:[%s2] sm:$0xff]
    %19 = vset.pattern.permute.xlu0 0
    %20 = vperm.xlu0 %19, %v16
    %v21 = vpop.permute.xlu0 %20
    %v23 = vmul.f32 %v15, %v21
    %25 = vset.pattern.permute.xlu0 0
    %26 = vperm.xlu0 %25, %v17
    %v27 = vpop.permute.xlu0 %26
    %v29 = vadd.f32 %v23, %v27
    %30 = vst [vmem:[#allocation2] sm:$0xff] %v29
    // Predicated region
    $region14: #{tpu_custom_call.1} parent=1 // pred_check
      _
    $region15: #{tpu_custom_call.1} parent=1 // pred_check_branch
      %32 = sbr.rel (0) target = $region17
    $region16: #{tpu_custom_call.1} parent=1 // pred_region
      %s34 = ssub.s32 128, 128
      %35 = vsyncadd [#allocation3], %s34
      %s37 = sshll.u32 [#allocation2], 4
      %s38 = int_to_ptr.vmem [resolvable:$true] %s37
      %40 = dma.vmem_to_hbm [thread:$0]  %s38, 128, %s3, [#allocation3]
    $region17: #{tpu_custom_call.1} parent=1 // pred_fallthru
      _
    // Predicated region
    $region18: #{tpu_custom_call.1} parent=1 // pred_check
      _
    $region19: #{tpu_custom_call.1} parent=1 // pred_check_branch
      %42 = sbr.rel (0) target = $region21
    $region20: #{tpu_custom_call.1} parent=1 // pred_region
      %43 = dma.done [#allocation3], 128
    $region21: #{tpu_custom_call.1} parent=1 // pred_fallthru
      _
    %44 = vsyncpa [#allocation3], 1

</llo_original>
